<compile_context>
chip_gen: v7x
topology: tpu7x:2x2x1
jax: 0.10.0
libtpu: 0.0.40
codegen_flags: <defaults>
</compile_context>

<pallas_src>
import jax
import jax.numpy as jnp
from jax import lax
from jax.experimental import pallas as pl
from jax.experimental.pallas import tpu as pltpu

IGNORE_INDEX = -100      # CrossEntropyLoss().ignore_index
LANE = 128               # pad num_labels up to one full lane tile
NEG_INF = -1e30          # bias for padded label lanes (exp() underflows to 0)


def token_cls_loss_kernel(starts_ref,            # SMEM (B, W) int32  (scalar prefetch)
                          seq_ref,               # VMEM (1, S, H) bf16
                          lab_ref,               # VMEM (1, W, 1) int32
                          w_ref,                 # VMEM (H, LP) bf16  (lane padded)
                          b_ref,                 # VMEM (1, LP) f32   (pad lanes = NEG_INF)
                          out_ref,               # VMEM (1, 1, LP) f32 per-sequence loss
                          seq_f32,               # scratch VMEM (S, H) f32
                          pooled_f32):           # scratch VMEM (W, H) f32
    b = pl.program_id(0)
    W = pooled_f32.shape[0]
    LP = w_ref.shape[1]
    f32 = jnp.float32

    # Stage the bf16 sequence tile as f32 once (dropout == identity in eval mode);
    # dynamic row slicing then operates on 32-bit sublanes (no packed-dtype indexing).
    seq_f32[...] = seq_ref[0].astype(f32)

    # ---- first_token_span_extractor: gather row seq[start_w] for each word w.
    # Start offsets are scalars in SMEM -> plain dynamic-sublane loads, no one-hot matmul.
    for w in range(W):                                   # W is small & static
        s = starts_ref[b, w]
        pooled_f32[pl.ds(w, 1), :] = seq_f32[pl.ds(s, 1), :]

    # ---- classifier Linear: (W, H) @ (H, LP) + bias  (LP = 128 -> lane-dense logits)
    logits = jnp.dot(pooled_f32[...], w_ref[...].astype(f32),
                     preferred_element_type=f32) + b_ref[...]         # (W, LP)

    # ---- per-sequence CrossEntropyLoss (mean over valid positions)
    labels = lab_ref[0]                                               # (W, 1) int32
    valid = (labels != IGNORE_INDEX).astype(f32)                      # (W, 1)
    lab_iota = lax.broadcasted_iota(jnp.int32, (W, LP), 1)
    lab_oh = (lab_iota == labels).astype(f32)                         # (W, LP)

    m = jnp.max(logits, axis=-1, keepdims=True)                       # (W, 1)
    lse = m + jnp.log(jnp.sum(jnp.exp(logits - m), axis=-1, keepdims=True))
    true_logit = jnp.sum(logits * lab_oh, axis=-1, keepdims=True)     # (W, 1)
    per_pos = (lse - true_logit) * valid                              # (W, 1)

    n_valid = jnp.maximum(jnp.sum(valid), 1.0)     # guard: all-ignored sequence -> 0 loss
    loss_b = jnp.sum(per_pos) / n_valid
    out_ref[...] = jnp.broadcast_to(loss_b, (1, 1, LP)).astype(f32)


@jax.jit
def token_classification_loss(seq_out, word_offsets, labels, cls_w, cls_b):
    B, S, H = seq_out.shape
    W = word_offsets.shape[1]
    L = cls_w.shape[1]
    LP = LANE

    starts = word_offsets[:, :, 0].astype(jnp.int32)                  # (B, W) -> SMEM
    labels3 = labels.reshape(B, W, 1).astype(jnp.int32)               # (B, W, 1)
    seq_bf16 = seq_out.astype(jnp.bfloat16)                           # halve HBM->VMEM bytes
    w_pad = jnp.zeros((H, LP), jnp.bfloat16).at[:, :L].set(cls_w.astype(jnp.bfloat16))
    b_pad = jnp.full((1, LP), NEG_INF, jnp.float32).at[0, :L].set(cls_b.astype(jnp.float32))

    per_seq = pl.pallas_call(
        token_cls_loss_kernel,
        out_shape=jax.ShapeDtypeStruct((B, 1, LP), jnp.float32),
        grid_spec=pltpu.PrefetchScalarGridSpec(
            num_scalar_prefetch=1,
            grid=(B,),
            in_specs=[
                pl.BlockSpec((1, S, H), lambda b, starts: (b, 0, 0)),  # seq, pipelined over B
                pl.BlockSpec((1, W, 1), lambda b, starts: (b, 0, 0)),  # labels
                pl.BlockSpec((H, LP), lambda b, starts: (0, 0)),       # classifier weight
                pl.BlockSpec((1, LP), lambda b, starts: (0, 0)),       # classifier bias
            ],
            out_specs=pl.BlockSpec((1, 1, LP), lambda b, starts: (b, 0, 0)),
            scratch_shapes=[
                pltpu.VMEM((S, H), jnp.float32),   # staged f32 sequence tile
                pltpu.VMEM((W, H), jnp.float32),   # pooled first-token rows
            ],
        ),
        compiler_params=pltpu.CompilerParams(
            dimension_semantics=("parallel",)),    # independent per-sequence losses
    )(starts, seq_bf16, labels3, w_pad, b_pad)

    # mean over batch of per-sequence CE losses == PyTorch forward's (sum / batch_size)
    return jnp.mean(per_seq[:, 0, 0])


def reference_loss(seq_out, word_offsets, labels, cls_w, cls_b):
    """Pure-JAX replica of the PyTorch forward (labels are prefix-padded with -100)."""
    pooled = jnp.take_along_axis(
        seq_out, word_offsets[:, :, 0:1].astype(jnp.int32), axis=1)     # (B, W, H)
    logits = pooled @ cls_w + cls_b                                     # (B, W, L)
    B = labels.shape[0]
    total = 0.0
    for b in range(B):
        mask = labels[b] != IGNORE_INDEX
        lab = labels[b][mask]
        lg = logits[b][: lab.shape[0]]
        logp = jax.nn.log_softmax(lg, axis=-1)
        total = total + (-jnp.mean(logp[jnp.arange(lab.shape[0]), lab]))
    return total / B


if __name__ == "__main__":
    B, S, H, W, L, VOCAB = 2, 16, 32, 8, 5, 64
    key = jax.random.PRNGKey(0)
    k_ids, k_emb, k_w, k_b, k_lab = jax.random.split(key, 5)

    # synthetic inputs consistent with the module's forward signature
    input_ids = jax.random.randint(k_ids, (B, S), 0, VOCAB, dtype=jnp.int32)
    attention_mask = jnp.ones((B, S), dtype=jnp.int32)  # unused by the synthetic encoder

    # word_offsets[b, j] = [start, end] of word j in input_ids (first_token pooling uses start)
    starts = jnp.tile(jnp.arange(W, dtype=jnp.int32)[None, :] * 2, (B, 1))
    word_offsets = jnp.stack([starts, starts + 1], axis=-1)             # (B, W, 2)

    # labels: prefix of valid ids in [0, L), padded with ignore_index
    raw_labels = jax.random.randint(k_lab, (B, W), 0, L, dtype=jnp.int32)
    valid_lens = jnp.array([W, W - 3], dtype=jnp.int32)
    pos = jnp.arange(W, dtype=jnp.int32)[None, :]
    labels = jnp.where(pos < valid_lens[:, None], raw_labels, IGNORE_INDEX)

    # deterministic parameters
    emb_table = jax.random.normal(k_emb, (VOCAB, H), dtype=jnp.float32) * 0.1
    cls_w = jax.random.normal(k_w, (H, L), dtype=jnp.float32) * 0.1
    cls_b = jax.random.normal(k_b, (L,), dtype=jnp.float32) * 0.01

    # synthetic encoder (glue): embedding lookup -> (B, S, H)
    seq_out = emb_table[input_ids]

    loss = token_classification_loss(seq_out, word_offsets, labels, cls_w, cls_b)
    jax.block_until_ready(loss)

    ref = reference_loss(seq_out, word_offsets, labels, cls_w, cls_b)
    # kernel keeps activations/weights in bf16 on the DMA path -> slightly looser tolerance
    assert jnp.allclose(loss, ref, rtol=2e-3, atol=2e-3), (loss, ref)

    print("KERNEL_OK")
</pallas_src>

<mosaic_0001>
module attributes {stable_mosaic.version = 11 : i64} {
  func.func @token_cls_loss_kernel(%arg0: i32, %arg1: memref<2x8xi32, #tpu.memory_space<smem>>, %arg2: memref<1x16x32xbf16, #tpu.memory_space<vmem>>, %arg3: memref<1x8x1xi32, #tpu.memory_space<vmem>>, %arg4: memref<32x128xbf16, #tpu.memory_space<vmem>>, %arg5: memref<1x128xf32, #tpu.memory_space<vmem>>, %arg6: memref<1x1x128xf32, #tpu.memory_space<vmem>>, %arg7: memref<16x32xf32, #tpu.memory_space<vmem>>, %arg8: memref<8x32xf32, #tpu.memory_space<vmem>>) attributes {dimension_semantics = [#tpu.dimension_semantics<parallel>], iteration_bounds = array<i64: 2>, scalar_prefetch = 1 : i64, scratch_operands = 2 : i64, tpu.core_type = #tpu.core_type<tc>, window_params = [{transform_indices = @transform_0, window_bounds = array<i64: 1, 16, 32>}, {transform_indices = @transform_1, window_bounds = array<i64: 1, 8, 1>}, {pipeline_mode = #tpu.pipeline_mode<synchronous>, transform_indices = @transform_2, window_bounds = array<i64: 32, 128>}, {pipeline_mode = #tpu.pipeline_mode<synchronous>, transform_indices = @transform_3, window_bounds = array<i64: 1, 128>}, {transform_indices = @transform_4, window_bounds = array<i64: 1, 1, 128>}]} {
    %c0 = arith.constant 0 : index
    %c0_0 = arith.constant 0 : index
    %c0_1 = arith.constant 0 : index
    %0 = vector.load %arg2[%c0, %c0_0, %c0_1] : memref<1x16x32xbf16, #tpu.memory_space<vmem>>, vector<1x16x32xbf16>
    %1 = vector.shape_cast %0 : vector<1x16x32xbf16> to vector<16x32xbf16>
    %2 = arith.extf %1 : vector<16x32xbf16> to vector<16x32xf32>
    %c0_2 = arith.constant 0 : index
    %c0_3 = arith.constant 0 : index
    %3 = vector.load %arg7[%c0_2, %c0_3] : memref<16x32xf32, #tpu.memory_space<vmem>>, vector<16x32xf32>
    tpu.vector_store %arg7[%c0_2, %c0_3], %2 {strides = array<i32>} : memref<16x32xf32, #tpu.memory_space<vmem>>, vector<16x32xf32>,
    %4 = arith.index_cast %arg0 : i32 to index
    %c0_4 = arith.constant 0 : index
    %5 = memref.load %arg1[%4, %c0_4] : memref<2x8xi32, #tpu.memory_space<smem>>
    %6 = arith.index_cast %5 : i32 to index
    %c0_5 = arith.constant 0 : index
    %7 = vector.load %arg7[%6, %c0_5] : memref<16x32xf32, #tpu.memory_space<vmem>>, vector<1x32xf32>
    %c0_6 = arith.constant 0 : index
    %c0_7 = arith.constant 0 : index
    %8 = vector.load %arg8[%c0_6, %c0_7] : memref<8x32xf32, #tpu.memory_space<vmem>>, vector<1x32xf32>
    tpu.vector_store %arg8[%c0_6, %c0_7], %7 {strides = array<i32>} : memref<8x32xf32, #tpu.memory_space<vmem>>, vector<1x32xf32>,
    %9 = arith.index_cast %arg0 : i32 to index
    %c1 = arith.constant 1 : index
    %10 = memref.load %arg1[%9, %c1] : memref<2x8xi32, #tpu.memory_space<smem>>
    %11 = arith.index_cast %10 : i32 to index
    %c0_8 = arith.constant 0 : index
    %12 = vector.load %arg7[%11, %c0_8] : memref<16x32xf32, #tpu.memory_space<vmem>>, vector<1x32xf32>
    %c1_9 = arith.constant 1 : index
    %c0_10 = arith.constant 0 : index
    %13 = vector.load %arg8[%c1_9, %c0_10] : memref<8x32xf32, #tpu.memory_space<vmem>>, vector<1x32xf32>
    tpu.vector_store %arg8[%c1_9, %c0_10], %12 {strides = array<i32>} : memref<8x32xf32, #tpu.memory_space<vmem>>, vector<1x32xf32>,
    %14 = arith.index_cast %arg0 : i32 to index
    %c2 = arith.constant 2 : index
    %15 = memref.load %arg1[%14, %c2] : memref<2x8xi32, #tpu.memory_space<smem>>
    %16 = arith.index_cast %15 : i32 to index
    %c0_11 = arith.constant 0 : index
    %17 = vector.load %arg7[%16, %c0_11] : memref<16x32xf32, #tpu.memory_space<vmem>>, vector<1x32xf32>
    %c2_12 = arith.constant 2 : index
    %c0_13 = arith.constant 0 : index
    %18 = vector.load %arg8[%c2_12, %c0_13] : memref<8x32xf32, #tpu.memory_space<vmem>>, vector<1x32xf32>
    tpu.vector_store %arg8[%c2_12, %c0_13], %17 {strides = array<i32>} : memref<8x32xf32, #tpu.memory_space<vmem>>, vector<1x32xf32>,
    %19 = arith.index_cast %arg0 : i32 to index
    %c3 = arith.constant 3 : index
    %20 = memref.load %arg1[%19, %c3] : memref<2x8xi32, #tpu.memory_space<smem>>
    %21 = arith.index_cast %20 : i32 to index
    %c0_14 = arith.constant 0 : index
    %22 = vector.load %arg7[%21, %c0_14] : memref<16x32xf32, #tpu.memory_space<vmem>>, vector<1x32xf32>
    %c3_15 = arith.constant 3 : index
    %c0_16 = arith.constant 0 : index
    %23 = vector.load %arg8[%c3_15, %c0_16] : memref<8x32xf32, #tpu.memory_space<vmem>>, vector<1x32xf32>
    tpu.vector_store %arg8[%c3_15, %c0_16], %22 {strides = array<i32>} : memref<8x32xf32, #tpu.memory_space<vmem>>, vector<1x32xf32>,
    %24 = arith.index_cast %arg0 : i32 to index
    %c4 = arith.constant 4 : index
    %25 = memref.load %arg1[%24, %c4] : memref<2x8xi32, #tpu.memory_space<smem>>
    %26 = arith.index_cast %25 : i32 to index
    %c0_17 = arith.constant 0 : index
    %27 = vector.load %arg7[%26, %c0_17] : memref<16x32xf32, #tpu.memory_space<vmem>>, vector<1x32xf32>
    %c4_18 = arith.constant 4 : index
    %c0_19 = arith.constant 0 : index
    %28 = vector.load %arg8[%c4_18, %c0_19] : memref<8x32xf32, #tpu.memory_space<vmem>>, vector<1x32xf32>
    tpu.vector_store %arg8[%c4_18, %c0_19], %27 {strides = array<i32>} : memref<8x32xf32, #tpu.memory_space<vmem>>, vector<1x32xf32>,
    %29 = arith.index_cast %arg0 : i32 to index
    %c5 = arith.constant 5 : index
    %30 = memref.load %arg1[%29, %c5] : memref<2x8xi32, #tpu.memory_space<smem>>
    %31 = arith.index_cast %30 : i32 to index
    %c0_20 = arith.constant 0 : index
    %32 = vector.load %arg7[%31, %c0_20] : memref<16x32xf32, #tpu.memory_space<vmem>>, vector<1x32xf32>
    %c5_21 = arith.constant 5 : index
    %c0_22 = arith.constant 0 : index
    %33 = vector.load %arg8[%c5_21, %c0_22] : memref<8x32xf32, #tpu.memory_space<vmem>>, vector<1x32xf32>
    tpu.vector_store %arg8[%c5_21, %c0_22], %32 {strides = array<i32>} : memref<8x32xf32, #tpu.memory_space<vmem>>, vector<1x32xf32>,
    %34 = arith.index_cast %arg0 : i32 to index
    %c6 = arith.constant 6 : index
    %35 = memref.load %arg1[%34, %c6] : memref<2x8xi32, #tpu.memory_space<smem>>
    %36 = arith.index_cast %35 : i32 to index
    %c0_23 = arith.constant 0 : index
    %37 = vector.load %arg7[%36, %c0_23] : memref<16x32xf32, #tpu.memory_space<vmem>>, vector<1x32xf32>
    %c6_24 = arith.constant 6 : index
    %c0_25 = arith.constant 0 : index
    %38 = vector.load %arg8[%c6_24, %c0_25] : memref<8x32xf32, #tpu.memory_space<vmem>>, vector<1x32xf32>
    tpu.vector_store %arg8[%c6_24, %c0_25], %37 {strides = array<i32>} : memref<8x32xf32, #tpu.memory_space<vmem>>, vector<1x32xf32>,
    %39 = arith.index_cast %arg0 : i32 to index
    %c7 = arith.constant 7 : index
    %40 = memref.load %arg1[%39, %c7] : memref<2x8xi32, #tpu.memory_space<smem>>
    %41 = arith.index_cast %40 : i32 to index
    %c0_26 = arith.constant 0 : index
    %42 = vector.load %arg7[%41, %c0_26] : memref<16x32xf32, #tpu.memory_space<vmem>>, vector<1x32xf32>
    %c7_27 = arith.constant 7 : index
    %c0_28 = arith.constant 0 : index
    %43 = vector.load %arg8[%c7_27, %c0_28] : memref<8x32xf32, #tpu.memory_space<vmem>>, vector<1x32xf32>
    tpu.vector_store %arg8[%c7_27, %c0_28], %42 {strides = array<i32>} : memref<8x32xf32, #tpu.memory_space<vmem>>, vector<1x32xf32>,
    %c0_29 = arith.constant 0 : index
    %c0_30 = arith.constant 0 : index
    %44 = vector.load %arg8[%c0_29, %c0_30] : memref<8x32xf32, #tpu.memory_space<vmem>>, vector<8x32xf32>
    %c0_31 = arith.constant 0 : index
    %c0_32 = arith.constant 0 : index
    %45 = vector.load %arg4[%c0_31, %c0_32] : memref<32x128xbf16, #tpu.memory_space<vmem>>, vector<32x128xbf16>
    %46 = arith.extf %45 : vector<32x128xbf16> to vector<32x128xf32>
    %cst = arith.constant dense<0.000000e+00> : vector<8x128xf32>
    %47 = tpu.matmul %44, %46, %cst {dimension_numbers = #tpu.dot_dimension_numbers<[1], [0], [0], [1], [0, 0, 1, 1], [], []>} : vector<8x32xf32>, vector<32x128xf32>, vector<8x128xf32> -> vector<8x128xf32>
    %c0_33 = arith.constant 0 : index
    %c0_34 = arith.constant 0 : index
    %48 = vector.load %arg5[%c0_33, %c0_34] : memref<1x128xf32, #tpu.memory_space<vmem>>, vector<1x128xf32>
    %49 = vector.broadcast %48 : vector<1x128xf32> to vector<8x128xf32>
    %50 = arith.addf %47, %49 : vector<8x128xf32>
    %c0_35 = arith.constant 0 : index
    %c0_36 = arith.constant 0 : index
    %c0_37 = arith.constant 0 : index
    %51 = vector.load %arg3[%c0_35, %c0_36, %c0_37] : memref<1x8x1xi32, #tpu.memory_space<vmem>>, vector<1x8x1xi32>
    %52 = vector.shape_cast %51 : vector<1x8x1xi32> to vector<8x1xi32>
    %c-100_i32 = arith.constant -100 : i32
    %53 = vector.broadcast %c-100_i32 : i32 to vector<8x1xi32>
    %54 = arith.cmpi ne, %52, %53 : vector<8x1xi32>
    %55 = arith.extui %54 : vector<8x1xi1> to vector<8x1xi32>
    %56 = arith.sitofp %55 : vector<8x1xi32> to vector<8x1xf32>
    %57 = tpu.iota {dimensions = array<i32: 1>} : vector<8x128xi32>
    %58 = vector.broadcast %52 : vector<8x1xi32> to vector<8x128xi32>
    %59 = arith.cmpi eq, %57, %58 : vector<8x128xi32>
    %60 = arith.extui %59 : vector<8x128xi1> to vector<8x128xi32>
    %61 = arith.sitofp %60 : vector<8x128xi32> to vector<8x128xf32>
    %cst_38 = arith.constant dense<0xFF800000> : vector<8xf32>
    %62 = vector.multi_reduction <maximumf>, %50, %cst_38 [1] : vector<8x128xf32> to vector<8xf32>
    %63 = vector.shape_cast %62 : vector<8xf32> to vector<8x1xf32>
    %64 = vector.broadcast %63 : vector<8x1xf32> to vector<8x128xf32>
    %65 = arith.subf %50, %64 : vector<8x128xf32>
    %66 = math.exp %65 : vector<8x128xf32>
    %cst_39 = arith.constant dense<0.000000e+00> : vector<8xf32>
    %67 = vector.multi_reduction <add>, %66, %cst_39 [1] : vector<8x128xf32> to vector<8xf32>
    %68 = vector.shape_cast %67 : vector<8xf32> to vector<8x1xf32>
    %69 = math.log %68 : vector<8x1xf32>
    %70 = arith.addf %63, %69 : vector<8x1xf32>
    %71 = arith.mulf %50, %61 : vector<8x128xf32>
    %cst_40 = arith.constant dense<0.000000e+00> : vector<8xf32>
    %72 = vector.multi_reduction <add>, %71, %cst_40 [1] : vector<8x128xf32> to vector<8xf32>
    %73 = vector.shape_cast %72 : vector<8xf32> to vector<8x1xf32>
    %74 = arith.subf %70, %73 : vector<8x1xf32>
    %75 = arith.mulf %74, %56 : vector<8x1xf32>
    %76 = vector.shape_cast %56 : vector<8x1xf32> to vector<1x8x1xf32>
    %cst_41 = arith.constant dense<0.000000e+00> : vector<1xf32>
    %77 = vector.multi_reduction <add>, %76, %cst_41 [1, 2] : vector<1x8x1xf32> to vector<1xf32>
    %78 = vector.shape_cast %77 : vector<1xf32> to vector<1x1x1xf32>
    %79 = vector.extract %78[0, 0, 0] : f32 from vector<1x1x1xf32>
    %cst_42 = arith.constant 1.000000e+00 : f32
    %80 = arith.maximumf %79, %cst_42 : f32
    %81 = vector.shape_cast %75 : vector<8x1xf32> to vector<1x8x1xf32>
    %cst_43 = arith.constant dense<0.000000e+00> : vector<1xf32>
    %82 = vector.multi_reduction <add>, %81, %cst_43 [1, 2] : vector<1x8x1xf32> to vector<1xf32>
    %83 = vector.shape_cast %82 : vector<1xf32> to vector<1x1x1xf32>
    %84 = vector.extract %83[0, 0, 0] : f32 from vector<1x1x1xf32>
    %85 = arith.divf %84, %80 : f32
    %86 = vector.broadcast %85 : f32 to vector<1x1x128xf32>
    %c0_44 = arith.constant 0 : index
    %c0_45 = arith.constant 0 : index
    %c0_46 = arith.constant 0 : index
    %87 = vector.load %arg6[%c0_44, %c0_45, %c0_46] : memref<1x1x128xf32, #tpu.memory_space<vmem>>, vector<1x1x128xf32>
    tpu.vector_store %arg6[%c0_44, %c0_45, %c0_46], %86 {strides = array<i32>} : memref<1x1x128xf32, #tpu.memory_space<vmem>>, vector<1x1x128xf32>,
    return
  }
  func.func @transform_0(%arg0: i32, %arg1: memref<2x8xi32, #tpu.memory_space<smem>>) -> (i32, i32, i32) {
    %c0_i32 = arith.constant 0 : i32
    %c0_i32_0 = arith.constant 0 : i32
    %c0_i32_1 = arith.constant 0 : i32
    return %arg0, %c0_i32, %c0_i32_0 : i32, i32, i32
  }
  func.func @transform_1(%arg0: i32, %arg1: memref<2x8xi32, #tpu.memory_space<smem>>) -> (i32, i32, i32) {
    %c0_i32 = arith.constant 0 : i32
    %c0_i32_0 = arith.constant 0 : i32
    %c0_i32_1 = arith.constant 0 : i32
    return %arg0, %c0_i32, %c0_i32_0 : i32, i32, i32
  }
  func.func @transform_2(%arg0: i32, %arg1: memref<2x8xi32, #tpu.memory_space<smem>>) -> (i32, i32) {
    %c0_i32 = arith.constant 0 : i32
    %c0_i32_0 = arith.constant 0 : i32
    %c0_i32_1 = arith.constant 0 : i32
    return %c0_i32, %c0_i32_0 : i32, i32
  }
  func.func @transform_3(%arg0: i32, %arg1: memref<2x8xi32, #tpu.memory_space<smem>>) -> (i32, i32) {
    %c0_i32 = arith.constant 0 : i32
    %c0_i32_0 = arith.constant 0 : i32
    %c0_i32_1 = arith.constant 0 : i32
    return %c0_i32, %c0_i32_0 : i32, i32
  }
  func.func @transform_4(%arg0: i32, %arg1: memref<2x8xi32, #tpu.memory_space<smem>>) -> (i32, i32, i32) {
    %c0_i32 = arith.constant 0 : i32
    %c0_i32_0 = arith.constant 0 : i32
    %c0_i32_1 = arith.constant 0 : i32
    return %arg0, %c0_i32, %c0_i32_0 : i32, i32, i32
  }
}

</mosaic_0001>

<llo_original>
// kernel: token_classification_loss.1
$region0: #{token_classification_loss.1}
  #allocation0 [shape = 'u32[]', space=smem, size = 0x4, offset = 0x4, fixed_abs, tag = 'smem constant byte address 0x4 - core index']
  #allocation1 [shape = 'u32[144,128]{1,0:T(1,128)}', space=vmem, size = 0x12000, scoped, tag = 'internal scratch']
  #allocation2 [shape = 'f32[16,32]{1,0:T(8,128)}', space=vmem, size = 0x2000, scoped, tag = 'scratch operand']
  #allocation3 [shape = 'f32[8,32]{1,0:T(8,128)}', space=vmem, size = 0x1000, scoped, tag = 'scratch operand']
  #allocation4 [shape = 's32[1]{0}', space=sflag, size = 0x4, scoped, tag = 'scoped memory for token_classification_loss.1']
  #allocation5 [shape = 'u8[1024]{0}', space=smem, size = 0x400, scoped, tag = 'prefetched SMEM operand 0']
  %s0 = inlined_call_operand.vmem [shape: s32[2,8], index: 0, kind: input, shape index: {}]
  %s1 = inlined_call_operand.vmem [shape: bf16[2,16,32], index: 1, kind: input, shape index: {}]
  %s2 = inlined_call_operand.vmem [shape: s32[2,8,1], index: 2, kind: input, shape index: {}]
  %s3 = inlined_call_operand.vmem [shape: bf16[32,128], index: 3, kind: input, shape index: {}]
  %s4 = inlined_call_operand.vmem [shape: f32[1,128], index: 4, kind: input, shape index: {}]
  %s5 = inlined_call_operand.vmem [shape: f32[2,1,128], index: 5, kind: output, shape index: {}]
  %s6 = sld [smem:[#allocation0]]
  $region49: #{token_classification_loss.1} parent=0
    _
  %s8 = ssub.s32 1, %s6
  %s9 = scalar_select 0, %s8, %s6
  %s10 = sshll.u32 %s0, 4
  %s11 = int_to_ptr.vmem [resolvable:$true] %s10
  %13 = dma.vmem_to_smem %s11, 32, [#allocation5], [#allocation4]
  %14 = dma.done [#allocation4], 32
  %15 = sfence
  loop: start=0, step=1, limit=4
  $region2: #{token_classification_loss.1} parent=0 // loop_pre_header
    _
  $region3: #{token_classification_loss.1} parent=0 // loop_header
    %s17 = sphi 0, %s21
    %p18 = scmp.ge.s32.totalorder %s17, 4
    %s27 = sphi 0, %s29
    %s30 = sphi 0, %s27
    %s31 = sphi 0, %s30
    %s47 = sphi 0, %s31
    %s53 = sphi 0, %s55
    %s56 = sphi 0, %s53
    %s57 = sphi 0, %s56
    %s73 = sphi 0, %s57
    %s77 = sphi 0, %s77
    %s79 = sphi 0, %s77
    %s80 = sphi 0, %s79
    %s94 = sphi 0, %s80
    %s98 = sphi 0, %s98
    %s100 = sphi 0, %s98
    %s101 = sphi 0, %s100
    %s115 = sphi 0, %s101
    %s121 = sphi 0, %s123
    %s124 = sphi 0, %s121
    %s125 = sphi 0, %s124
    %s141 = sphi 0, %s125
  $region4: #{token_classification_loss.1} parent=0 // loop_header_branch
    %20 = sbr.rel (%p18) target = $region8
  $region5: #{token_classification_loss.1} parent=0 // loop_body
    %s22 = ssub.s32 %s17, 1
    %s23 = ssub.s32 %s17, 2
    %s24 = sadd.s32 %s17, 1
    %s25 = ssub.s32 %s17, %s24
    %p26 = scmp.eq.s32.totalorder %s25, 0
    %s28 = sadd.s32 %s27, 1
    %s29 = scalar_select %p26, %s27, %s28
    %p32 = pneg %p26
    %p33 = scmp.eq.s32.totalorder %s17, 1
    %p34 = por %p32, %p33
    %p35 = scmp.ne.s32.totalorder %s27, %s30
    %p36 = scmp.eq.s32.totalorder %s17, 0
    %p37 = por %p35, %p36
    %p38 = scmp.ne.s32.totalorder %s27, %s30
    %p39 = scmp.eq.s32.totalorder %s22, 1
    %p40 = por %p38, %p39
    %p41 = scmp.ne.s32.totalorder %s30, %s31
    %p42 = scmp.eq.s32.totalorder %s22, 0
    %p43 = por %p41, %p42
    %p44 = scmp.ne.s32.totalorder %s30, %s31
    %p45 = scmp.eq.s32.totalorder %s23, 1
    %p46 = por %p44, %p45
    %p48 = scmp.ne.s32.totalorder %s31, %s47
    %p49 = scmp.eq.s32.totalorder %s23, 0
    %p50 = por %p48, %p49
    %s51 = ssub.s32 %s17, %s24
    %p52 = scmp.eq.s32.totalorder %s51, 0
    %s54 = sadd.s32 %s53, 1
    %s55 = scalar_select %p52, %s53, %s54
    %p58 = pneg %p52
    %p59 = scmp.eq.s32.totalorder %s17, 1
    %p60 = por %p58, %p59
    %p61 = scmp.ne.s32.totalorder %s53, %s56
    %p62 = scmp.eq.s32.totalorder %s17, 0
    %p63 = por %p61, %p62
    %p64 = scmp.ne.s32.totalorder %s53, %s56
    %p65 = scmp.eq.s32.totalorder %s22, 1
    %p66 = por %p64, %p65
    %p67 = scmp.ne.s32.totalorder %s56, %s57
    %p68 = scmp.eq.s32.totalorder %s22, 0
    %p69 = por %p67, %p68
    %p70 = scmp.ne.s32.totalorder %s56, %s57
    %p71 = scmp.eq.s32.totalorder %s23, 1
    %p72 = por %p70, %p71
    %p74 = scmp.ne.s32.totalorder %s57, %s73
    %p75 = scmp.eq.s32.totalorder %s23, 0
    %p76 = por %p74, %p75
    %s78 = sadd.s32 %s77, 1
    %p81 = scmp.eq.s32.totalorder %s17, 1
    %p82 = scmp.ne.s32.totalorder %s77, %s79
    %p83 = scmp.eq.s32.totalorder %s17, 0
    %p84 = por %p82, %p83
    %p85 = scmp.ne.s32.totalorder %s77, %s79
    %p86 = scmp.eq.s32.totalorder %s22, 1
    %p87 = por %p85, %p86
    %p88 = scmp.ne.s32.totalorder %s79, %s80
    %p89 = scmp.eq.s32.totalorder %s22, 0
    %p90 = por %p88, %p89
    %p91 = scmp.ne.s32.totalorder %s79, %s80
    %p92 = scmp.eq.s32.totalorder %s23, 1
    %p93 = por %p91, %p92
    %p95 = scmp.ne.s32.totalorder %s80, %s94
    %p96 = scmp.eq.s32.totalorder %s23, 0
    %p97 = por %p95, %p96
    %s99 = sadd.s32 %s98, 1
    %p102 = scmp.eq.s32.totalorder %s17, 1
    %p103 = scmp.ne.s32.totalorder %s98, %s100
    %p104 = scmp.eq.s32.totalorder %s17, 0
    %p105 = por %p103, %p104
    %p106 = scmp.ne.s32.totalorder %s98, %s100
    %p107 = scmp.eq.s32.totalorder %s22, 1
    %p108 = por %p106, %p107
    %p109 = scmp.ne.s32.totalorder %s100, %s101
    %p110 = scmp.eq.s32.totalorder %s22, 0
    %p111 = por %p109, %p110
    %p112 = scmp.ne.s32.totalorder %s100, %s101
    %p113 = scmp.eq.s32.totalorder %s23, 1
    %p114 = por %p112, %p113
    %p116 = scmp.ne.s32.totalorder %s101, %s115
    %p117 = scmp.eq.s32.totalorder %s23, 0
    %p118 = por %p116, %p117
    %s119 = ssub.s32 %s17, %s24
    %p120 = scmp.eq.s32.totalorder %s119, 0
    %s122 = sadd.s32 %s121, 1
    %s123 = scalar_select %p120, %s121, %s122
    %p126 = pneg %p120
    %p127 = scmp.eq.s32.totalorder %s17, 1
    %p128 = por %p126, %p127
    %p129 = scmp.ne.s32.totalorder %s121, %s124
    %p130 = scmp.eq.s32.totalorder %s17, 0
    %p131 = por %p129, %p130
    %p132 = scmp.ne.s32.totalorder %s121, %s124
    %p133 = scmp.eq.s32.totalorder %s22, 1
    %p134 = por %p132, %p133
    %p135 = scmp.ne.s32.totalorder %s124, %s125
    %p136 = scmp.eq.s32.totalorder %s22, 0
    %p137 = por %p135, %p136
    %p138 = scmp.ne.s32.totalorder %s124, %s125
    %p139 = scmp.eq.s32.totalorder %s23, 1
    %p140 = por %p138, %p139
    %p142 = scmp.ne.s32.totalorder %s125, %s141
    %p143 = scmp.eq.s32.totalorder %s23, 0
    %p144 = por %p142, %p143
    %p145 = scmp.le.s32.totalorder 1, %s17
    %p146 = scmp.lt.s32.totalorder %s17, 3
    %p147 = pnand %p145, %p146
    %p148 = pneg %p147
    // Predicated region
    $region9: #{token_classification_loss.1} parent=5 // pred_check
      _
    $region10: #{token_classification_loss.1} parent=5 // pred_check_branch
      %150 = sbr.rel (%p147) target = $region12
    $region11: #{token_classification_loss.1} parent=5 // pred_region
      %s151 = ssub.s32 %s17, 1
      // Predicated region
      $region13: #{token_classification_loss.1} parent=11 // pred_check
        %p152 = pneg %p90
      $region14: #{token_classification_loss.1} parent=11 // pred_check_branch
        %154 = sbr.rel (%p152) target = $region16
      $region15: #{token_classification_loss.1} parent=11 // pred_region
        _
      $region16: #{token_classification_loss.1} parent=11 // pred_fallthru
        _
      // Predicated region
      $region17: #{token_classification_loss.1} parent=11 // pred_check
        %p155 = pneg %p111
      $region18: #{token_classification_loss.1} parent=11 // pred_check_branch
        %157 = sbr.rel (%p155) target = $region20
      $region19: #{token_classification_loss.1} parent=11 // pred_region
        _
      $region20: #{token_classification_loss.1} parent=11 // pred_fallthru
        _
    $region12: #{token_classification_loss.1} parent=5 // pred_fallthru
      _
    %p158 = scmp.lt.s32.totalorder %s17, 2
    // Predicated region
    $region21: #{token_classification_loss.1} parent=5 // pred_check
      %p159 = pneg %p158
    $region22: #{token_classification_loss.1} parent=5 // pred_check_branch
      %161 = sbr.rel (%p159) target = $region24
    $region23: #{token_classification_loss.1} parent=5 // pred_region
      // Predicated region
      $region25: #{token_classification_loss.1} parent=23 // pred_check
        %p162 = pneg %p37
      $region26: #{token_classification_loss.1} parent=23 // pred_check_branch
        %164 = sbr.rel (%p162) target = $region28
      $region27: #{token_classification_loss.1} parent=23 // pred_region
        %p165 = scmp.lt.s32.totalorder %s17, 1
        %s166 = scalar_select %p165, %s17, 1
        %s167 = smul.addr %s166, 2
        %s168 = smul.addr %s167, 4
        %s169 = scalar_lea.vmem %s1, %s168
      $region28: #{token_classification_loss.1} parent=23 // pred_fallthru
        _
      // Predicated region
      $region29: #{token_classification_loss.1} parent=23 // pred_check
        %p170 = pneg %p63
      $region30: #{token_classification_loss.1} parent=23 // pred_check_branch
        %172 = sbr.rel (%p170) target = $region32
      $region31: #{token_classification_loss.1} parent=23 // pred_region
        %p173 = scmp.lt.s32.totalorder %s17, 1
        %s174 = scalar_select %p173, %s17, 1
        %s175 = smul.addr %s174, 8
        %s176 = scalar_lea.vmem %s2, %s175
      $region32: #{token_classification_loss.1} parent=23 // pred_fallthru
        _
    $region24: #{token_classification_loss.1} parent=5 // pred_fallthru
      _
    %p177 = scmp.le.s32.totalorder 1, %s17
    %p178 = scmp.lt.s32.totalorder %s17, 3
    %p179 = pnand %p177, %p178
    %p180 = pneg %p179
    // Predicated region
    $region33: #{token_classification_loss.1} parent=5 // pred_check
      _
    $region34: #{token_classification_loss.1} parent=5 // pred_check_branch
      %182 = sbr.rel (%p179) target = $region36
    $region35: #{token_classification_loss.1} parent=5 // pred_region
      %s183 = ssub.s32 %s17, 1
      %p184 = scmp.lt.s32.totalorder %s22, 1
      %s185 = scalar_select %p184, %s22, 1
      %s186 = smul.addr %s185, 2
      %s187 = smul.addr %s186, 4
      %s188 = scalar_lea.vmem %s1, %s187
      %p189 = pneg %p43
      %p190 = pneg %p40
      %p191 = scmp.lt.s32.totalorder %s22, 1
      %s192 = scalar_select %p191, %s22, 1
      %s193 = smul.addr %s192, 8
      %s194 = scalar_lea.vmem %s2, %s193
      %p195 = pneg %p69
      %p196 = pneg %p66
      %p197 = pneg %p90
      %p198 = pneg %p87
      %p199 = pneg %p111
      %p200 = pneg %p108
      %p201 = pneg %p137
      %p202 = pneg %p134
      %p203 = scmp.lt.s32.totalorder %s22, 1
      %s204 = scalar_select %p203, %s22, 1
      %s205 = scalar_lea.vmem %s5, %s204
      %p206 = scmp.lt.s32.totalorder %s22, 1
      %s207 = scalar_select %p206, %s22, 1
      %s208 = smul.addr %s207, 2
      %s209 = smul.addr %s208, 4
      %s210 = scalar_lea.vmem %s1, %s209
      %p211 = scmp.lt.s32.totalorder %s22, 1
      %s212 = scalar_select %p211, %s22, 1
      %s213 = smul.addr %s212, 8
      %s214 = scalar_lea.vmem %s2, %s213
      %p215 = scmp.lt.s32.totalorder %s22, 1
      %s216 = scalar_select %p215, %s22, 1
      %s217 = scalar_lea.vmem %s5, %s216
      %v218 = vld [vmem:[%s210] sm:$0xf]
      %v219 = vld [vmem:[%s210 + $0x4] sm:$0xf]
      %v220 = vunpack.c.l.bf16 %v218
      %v221 = vunpack.c.l.bf16 %v219
      %vm222 = vcmask 261120
      %223 = vst.msk [vmem:[#allocation2] sm:$0xff] %vm222, %v220
      %224 = vst.msk [vmem:[#allocation2 + $0x8] sm:$0xff] %vm222, %v221
      %s225 = smul.u32 %s22, 128
      %s226 = sld [smem:[#allocation5 + %s225]]
      %s227 = scalar_lea.vmem [#allocation2], %s226
      %v228 = vld [vmem:[%s227] sm:$0x1]
      %vm229 = vcmask 253952
      %230 = vst.msk [vmem:[#allocation3] sm:$0x1] %vm229, %v228
      %s231 = sadd.s32 %s225, 1
      %s232 = sld [smem:[#allocation5 + %s231]]
      %s233 = scalar_lea.vmem [#allocation2], %s232
      %v234 = vld [vmem:[%s233] sm:$0x1]
      %235 = vst.msk [vmem:[#allocation3 + $0x1] sm:$0x1] %vm229, %v234
      %s236 = sadd.s32 %s225, 2
      %s237 = sld [smem:[#allocation5 + %s236]]
      %s238 = scalar_lea.vmem [#allocation2], %s237
      %v239 = vld [vmem:[%s238] sm:$0x1]
      %240 = vst.msk [vmem:[#allocation3 + $0x2] sm:$0x1] %vm229, %v239
      %s241 = sadd.s32 %s225, 3
      %s242 = sld [smem:[#allocation5 + %s241]]
      %s243 = scalar_lea.vmem [#allocation2], %s242
      %v244 = vld [vmem:[%s243] sm:$0x1]
      %245 = vst.msk [vmem:[#allocation3 + $0x3] sm:$0x1] %vm229, %v244
      %s246 = sadd.s32 %s225, 4
      %s247 = sld [smem:[#allocation5 + %s246]]
      %s248 = scalar_lea.vmem [#allocation2], %s247
      %v249 = vld [vmem:[%s248] sm:$0x1]
      %250 = vst.msk [vmem:[#allocation3 + $0x4] sm:$0x1] %vm229, %v249
      %s251 = sadd.s32 %s225, 5
      %s252 = sld [smem:[#allocation5 + %s251]]
      %s253 = scalar_lea.vmem [#allocation2], %s252
      %v254 = vld [vmem:[%s253] sm:$0x1]
      %255 = vst.msk [vmem:[#allocation3 + $0x5] sm:$0x1] %vm229, %v254
      %s256 = sadd.s32 %s225, 6
      %s257 = sld [smem:[#allocation5 + %s256]]
      %s258 = scalar_lea.vmem [#allocation2], %s257
      %v259 = vld [vmem:[%s258] sm:$0x1]
      %260 = vst.msk [vmem:[#allocation3 + $0x6] sm:$0x1] %vm229, %v259
      %s261 = sadd.s32 %s225, 7
      %s262 = sld [smem:[#allocation5 + %s261]]
      %s263 = scalar_lea.vmem [#allocation2], %s262
      %v264 = vld [vmem:[%s263] sm:$0x1]
      %265 = vst.msk [vmem:[#allocation3 + $0x7] sm:$0x1] %vm229, %v264
      %v266 = vld [vmem:[#allocation3] sm:$0xff]
      %v267 = vld [vmem:[%s3] sm:$0xf]
      %v268 = vld [vmem:[%s3 + $0x4] sm:$0xf]
      %v269 = vld [vmem:[%s3 + $0x8] sm:$0xf]
      %v270 = vld [vmem:[%s3 + $0xc] sm:$0xf]
      %v271 = vunpack.c.l.bf16 %v267
      %v272 = vunpack.c.l.bf16 %v268
      %v273 = vunpack.c.l.bf16 %v269
      %v274 = vunpack.c.l.bf16 %v270
      %v275 = vld [vmem:[%s4] sm:$0x1]
      %v277 = vlaneseq
      %v278 = vshrl.u32 %v277, 7
      %v279 = vsub.s32 0, %v278
      %v280 = vrot.slane %v275, %v279
      %v283 = vsel %vm222, %v266, 0
      %285 = vmatprep.subr.mxu0 0.0
      %286 = vmatpush1.msra.mxu0 %v271
      %287 = vmatprep.subr.mxu0 0.0
      %288 = vmatpush1.msra.mxu0 %v272
      %289 = vmatprep.subr.mxu0 0.0
      %290 = vmatpush1.msra.mxu0 %v273
      %291 = vmatprep.subr.mxu0 0.0
      %292 = vmatpush1.msra.mxu0 %v274
      %293 = vmatprep.subr.mxu0 0.0
      %294 = vmatpush1.msra.mxu0 0.0
      %295 = vmatprep.subr.mxu0 0.0
      %296 = vmatpush1.msra.mxu0 0.0
      %297 = vmatprep.subr.mxu0 0.0
      %298 = vmatpush1.msra.mxu0 0.0
      %299 = vmatprep.subr.mxu0 0.0
      %300 = vmatpush1.msra.mxu0 0.0
      %301 = vmatprep.subr.mxu0 0.0
      %302 = vmatpush1.msra.mxu0 0.0
      %303 = vmatprep.subr.mxu0 0.0
      %304 = vmatpush1.msra.mxu0 0.0
      %305 = vmatprep.subr.mxu0 0.0
      %306 = vmatpush1.msra.mxu0 0.0
      %307 = vmatprep.subr.mxu0 0.0
      %308 = vmatpush1.msra.mxu0 0.0
      %309 = vmatprep.subr.mxu0 0.0
      %310 = vmatpush1.msra.mxu0 0.0
      %311 = vmatprep.subr.mxu0 0.0
      %312 = vmatpush1.msra.mxu0 0.0
      %313 = vmatprep.subr.mxu0 0.0
      %314 = vmatpush1.msra.mxu0 0.0
      %315 = vmatprep.subr.mxu0 0.0
      %316 = vmatpush1.msra.mxu0 0.0
      %317 = vmatprep.subr.mxu0 0.0
      %318 = vmatpush1.msra.mxu0 0.0
      %319 = vmatprep.subr.mxu0 0.0
      %320 = vmatpush1.msra.mxu0 0.0
      %321 = vmatprep.subr.mxu0 0.0
      %322 = vmatpush1.msra.mxu0 0.0
      %323 = vmatprep.subr.mxu0 0.0
      %324 = vmatpush1.msra.mxu0 0.0
      %325 = vmatprep.subr.mxu0 0.0
      %326 = vmatpush1.msra.mxu0 0.0
      %327 = vmatprep.subr.mxu0 0.0
      %328 = vmatpush1.msra.mxu0 0.0
      %329 = vmatprep.subr.mxu0 0.0
      %330 = vmatpush1.msra.mxu0 0.0
      %331 = vmatprep.subr.mxu0 0.0
      %332 = vmatpush1.msra.mxu0 0.0
      %333 = vmatprep.subr.mxu0 0.0
      %334 = vmatpush1.msra.mxu0 0.0
      %335 = vmatprep.subr.mxu0 0.0
      %336 = vmatpush1.msra.mxu0 0.0
      %337 = vmatprep.subr.mxu0 0.0
      %338 = vmatpush1.msra.mxu0 0.0
      %339 = vmatprep.subr.mxu0 0.0
      %340 = vmatpush1.msra.mxu0 0.0
      %341 = vmatprep.subr.mxu0 0.0
      %342 = vmatpush1.msra.mxu0 0.0
      %343 = vmatprep.subr.mxu0 0.0
      %344 = vmatpush1.msra.mxu0 0.0
      %345 = vmatprep.subr.mxu0 0.0
      %346 = vmatpush1.msra.mxu0 0.0
      %347 = vmatprep.subr.mxu0 0.0
      %348 = vmatpush1.msra.mxu0 0.0
      %349 = vmatprep.mubr.f32.mxu0 0.0
      %350 = vmatmul.mubr.f32.gmra.mrb[0].mxu0 %v283
      %v351 = vpop.f32.mrb[0].mxu0
      %v352 = vadd.f32 %v280, %v351
      %v353 = vpop.f32.mrb[0].mxu0
      %354 = vdwg.mxu0
      %v355 = vld [vmem:[%s214] sm:$0xff]
      %vm356 = vcmp.ne.s32.totalorder %v355, 4294967196
      %v357 = vsel %vm356, 1, 0
      %v358 = vcvt.s32.f32 %v357
      %v359 = vlaneseq
      %v360 = vand.u32 %v359, 127
      %361 = vset.pattern.permute.xlu0 0
      %362 = vperm.xlu0 %361, %v355
      %v363 = vpop.permute.xlu0 %362
      %vm364 = vcmp.eq.s32.totalorder %v360, %v363
      %v365 = vsel %vm364, 1, 0
      %v366 = vcvt.s32.f32 %v365
      %367 = vmax.xlane.f32.xlu0 %v352
      %v368 = vpop.xlane.xlu0 %367
      %v369 = vsub.f32 %v352, %v368
      %v370 = vmul.f32 %v369, 1.442695
      %v371 = vpow.pop %v370
      %372 = vadd.xlane.f32.xlu0 %v371
      %v373 = vpop.xlane.xlu0 %372
      %v374 = vlog2.pop %v373
      %v375 = vmul.f32 %v374, 0.6931472
      %v376 = vadd.f32 %v368, %v375
      %v377 = vmul.f32 %v352, %v366
      %378 = vadd.xlane.f32.xlu0 %v377
      %v379 = vpop.xlane.xlu0 %378
      %v380 = vsub.f32 %v376, %v379
      %v381 = vmul.f32 %v380, %v358
      %vm382 = vcmask 7168
      %v383 = vsel %vm382, %v358, 0.0
      %384 = vadd.xlane.f32.xlu0 %v383
      %v385 = vpop.xlane.xlu0 %384
      %v386 = vrot.slane %v385, 4
      %v387 = vadd.f32 %v385, %v386
      %v388 = vrot.slane %v387, 2
      %v389 = vadd.f32 %v387, %v388
      %v390 = vrot.slane %v389, 1
      %v391 = vadd.f32 %v389, %v390
      %s392 = vtos %v391
      %s393 = smax.f32 %s392, 1.0
      %v394 = vsel %vm382, %v381, 0.0
      %395 = vadd.xlane.f32.xlu0 %v394
      %v396 = vpop.xlane.xlu0 %395
      %v397 = vrot.slane %v396, 4
      %v398 = vadd.f32 %v396, %v397
      %v399 = vrot.slane %v398, 2
      %v400 = vadd.f32 %v398, %v399
      %v401 = vrot.slane %v400, 1
      %v402 = vadd.f32 %v400, %v401
      %s403 = vtos %v402
      %v404 = vstv %s393
      %v405 = vrcp.pop %v404
      %s406 = vtos %v405
      %s407 = smul.f32 %s403, %s406
      %v408 = vstv %s407
      %409 = vst [vmem:[%s217] sm:$0x1] %v408
      %p410 = scmp.lt.s32.totalorder %s22, 1
      %s411 = scalar_select %p410, %s22, 1
      %s412 = scalar_lea.vmem %s5, %s411
      // Predicated region
      $region37: #{token_classification_loss.1} parent=35 // pred_check
        %p413 = pneg %p134
      $region38: #{token_classification_loss.1} parent=35 // pred_check_branch
        %415 = sbr.rel (%p413) target = $region40
      $region39: #{token_classification_loss.1} parent=35 // pred_region
        _
      $region40: #{token_classification_loss.1} parent=35 // pred_fallthru
        _
    $region36: #{token_classification_loss.1} parent=5 // pred_fallthru
      _
    %p416 = scmp.le.s32.totalorder 2, %s17
    // Predicated region
    $region41: #{token_classification_loss.1} parent=5 // pred_check
      %p417 = pneg %p416
    $region42: #{token_classification_loss.1} parent=5 // pred_check_branch
      %419 = sbr.rel (%p417) target = $region44
    $region43: #{token_classification_loss.1} parent=5 // pred_region
      %s420 = ssub.s32 %s17, 2
      // Predicated region
      $region45: #{token_classification_loss.1} parent=43 // pred_check
        %p421 = pneg %p140
      $region46: #{token_classification_loss.1} parent=43 // pred_check_branch
        %423 = sbr.rel (%p421) target = $region48
      $region47: #{token_classification_loss.1} parent=43 // pred_region
        %p424 = scmp.lt.s32.totalorder %s23, 1
        %s425 = scalar_select %p424, %s23, 1
        %s426 = scalar_lea.vmem %s5, %s425
      $region48: #{token_classification_loss.1} parent=43 // pred_fallthru
        _
    $region44: #{token_classification_loss.1} parent=5 // pred_fallthru
      _
  $region6: #{token_classification_loss.1} parent=0 // loop_footer
    %s21 = sadd.s32 1, %s17
  $region7: #{token_classification_loss.1} parent=0 // loop_footer_branch
    %16 = sbr.rel target = $region3
  $region8: #{token_classification_loss.1} parent=0 // loop_exit
    _

</llo_original>
